<compile_context>
chip_gen: v7x
topology: tpu7x:2x2x1
jax: 0.10.0
libtpu: 0.0.40
codegen_flags: <defaults>
</compile_context>

<pallas_src>
import jax
import jax.numpy as jnp
import numpy as np
from jax.experimental import pallas as pl
from jax.experimental.pallas import tpu as pltpu

_NEG = -1e30  # additive mask value for invalid tail time positions


def _cnn_proj_kernel(x_ref, w_ref, b_ref, mask_ref, out_ref):
    # x block: (TB, S, E); w: (E, KH*C3); b: (1, C3); mask: (S, C3); out: (TB, C3)
    tb, s, e = x_ref.shape
    c3 = out_ref.shape[1]
    kh = w_ref.shape[1] // c3
    m = tb * s

    x_flat = x_ref[...].reshape(m, e)
    # Single wide matmul: all taps x all conv groups side by side along N.
    p = jnp.dot(x_flat, w_ref[...], preferred_element_type=jnp.float32)   # (M, KH*C3)

    # acc[r, j] = sum_dh p[r + dh, dh*C3 + j]   (shift commutes with row-wise matmul).
    acc = p[:, 0:c3]
    for dh in range(1, kh):                      # static unrolled, kh = 7
        tap = p[:, dh * c3:(dh + 1) * c3]
        # Rows that wrap to the top of the block (and rows crossing a batch element's
        # sequence boundary) only feed masked tail positions -> harmless.
        shifted = jnp.concatenate([tap[dh:, :], tap[:dh, :]], axis=0)
        acc = acc + shifted

    # Mask invalid tail positions per conv-group kernel height, max over time (XLU),
    # then bias + ReLU on the pooled (TB, C3) tile only.
    acc = acc.reshape(tb, s, c3) + mask_ref[...][None, :, :]
    pooled = jnp.max(acc, axis=1)                                         # (TB, C3)
    out_ref[...] = jnp.maximum(pooled + b_ref[...], 0.0).astype(out_ref.dtype)


def cnn_projection(x, w1, b1, w2, b2, w3, b3, *, tb=128):
    """x: (B, S, E) f32.  w_k: (kh_k, E, C) (torch Conv2d (C,1,kh,E) re-laid).  b_k: (1, C).
    Returns (B, 3*C) with channel order [conv1 | conv2 | conv3] (matches torch.cat)."""
    B, S, E = x.shape
    k1, k2, k3 = w1.shape[0], w2.shape[0], w3.shape[0]
    C = w1.shape[2]
    KH = max(k1, k2, k3)
    C3 = 3 * C
    if S < KH:
        raise ValueError(f"seq_len={S} must be >= max kernel height {KH}")

    # Fused wide weight (E, KH*C3): per tap, columns are [conv1 | conv2 | conv3];
    # taps beyond a conv's kernel height are zero.
    def pad_taps(w):
        return jnp.pad(w, ((0, KH - w.shape[0]), (0, 0), (0, 0)))
    w_all = jnp.concatenate([pad_taps(w1), pad_taps(w2), pad_taps(w3)], axis=2)  # (KH,E,C3)
    w_wide = jnp.transpose(w_all, (1, 0, 2)).reshape(E, KH * C3).astype(jnp.float32)
    b_all = jnp.concatenate([b1, b2, b3], axis=1).astype(jnp.float32)            # (1, C3)

    # Static additive tail mask: position t is valid for group g iff t <= S - kh_g.
    kh_per_ch = np.concatenate([np.full(C, k1), np.full(C, k2), np.full(C, k3)])
    t_idx = np.arange(S)[:, None]
    mask_np = np.where(t_idx <= (S - kh_per_ch)[None, :], 0.0, _NEG).astype(np.float32)
    mask = jnp.asarray(mask_np)                                                  # (S, C3)

    # Batch tile: multiple of 8, clamped so tiny batches don't over-pad.
    def rup(v, m):
        return ((v + m - 1) // m) * m
    tb = max(8, min(rup(tb, 8), rup(B, 8)))
    num_blocks = pl.cdiv(B, tb)
    B_pad = num_blocks * tb
    if B_pad != B:
        x = jnp.pad(x, ((0, B_pad - B), (0, 0), (0, 0)))

    grid_spec = pltpu.PrefetchScalarGridSpec(
        num_scalar_prefetch=0,
        grid=(num_blocks,),
        in_specs=[
            pl.BlockSpec((tb, S, E), lambda i: (i, 0, 0)),
            # Constant index_maps -> weights / bias / mask stay resident across steps.
            pl.BlockSpec((E, KH * C3), lambda i: (0, 0)),
            pl.BlockSpec((1, C3), lambda i: (0, 0)),
            pl.BlockSpec((S, C3), lambda i: (0, 0)),
        ],
        out_specs=pl.BlockSpec((tb, C3), lambda i: (i, 0)),
    )
    out = pl.pallas_call(
        _cnn_proj_kernel,
        out_shape=jax.ShapeDtypeStruct((B_pad, C3), x.dtype),
        grid_spec=grid_spec,
        compiler_params=pltpu.CompilerParams(dimension_semantics=("parallel",)),
    )(x, w_wide, b_all, mask)
    return out[:B]


def _reference(x, w1, b1, w2, b2, w3, b3):
    """Pure-JAX reference mirroring the PyTorch forward (eval mode)."""
    def block(w, b):
        kh = w.shape[0]
        T = x.shape[1] - kh + 1
        acc = jnp.zeros((x.shape[0], T, w.shape[2]), jnp.float32)
        for dh in range(kh):
            acc = acc + jnp.einsum("bte,ec->btc", x[:, dh:dh + T, :], w[dh])
        acc = jax.nn.relu(acc + b[0][None, None, :])
        return jnp.max(acc, axis=1)
    return jnp.concatenate([block(w1, b1), block(w2, b2), block(w3, b3)], axis=1)


if __name__ == "__main__":
    B, S, E, C = 2, 16, 32, 8          # batch, seq_len, embedding_dim, out_channels
    kernel_heights = [3, 5, 7]

    key = jax.random.PRNGKey(0)
    kx, kw1, kw2, kw3, kb1, kb2, kb3 = jax.random.split(key, 7)

    x = jax.random.normal(kx, (B, S, E), jnp.float32)
    # Conv2d weight in torch is (C, 1, kh, E) -> stored here as (kh, E, C).
    w1 = jax.random.normal(kw1, (kernel_heights[0], E, C), jnp.float32) * 0.1
    w2 = jax.random.normal(kw2, (kernel_heights[1], E, C), jnp.float32) * 0.1
    w3 = jax.random.normal(kw3, (kernel_heights[2], E, C), jnp.float32) * 0.1
    b1 = jax.random.normal(kb1, (1, C), jnp.float32) * 0.1
    b2 = jax.random.normal(kb2, (1, C), jnp.float32) * 0.1
    b3 = jax.random.normal(kb3, (1, C), jnp.float32) * 0.1

    out = cnn_projection(x, w1, b1, w2, b2, w3, b3)
    out = jax.block_until_ready(out)

    ref = _reference(x, w1, b1, w2, b2, w3, b3)
    np.testing.assert_allclose(np.asarray(out), np.asarray(ref), rtol=1e-4, atol=1e-4)

    print("KERNEL_OK")
</pallas_src>

<mosaic_0001>
module attributes {stable_mosaic.version = 11 : i64} {
  func.func @_cnn_proj_kernel(%arg0: i32, %arg1: memref<8x16x32xf32, #tpu.memory_space<vmem>>, %arg2: memref<32x168xf32, #tpu.memory_space<vmem>>, %arg3: memref<1x24xf32, #tpu.memory_space<vmem>>, %arg4: memref<16x24xf32, #tpu.memory_space<vmem>>, %arg5: memref<8x24xf32, #tpu.memory_space<vmem>>) attributes {dimension_semantics = [#tpu.dimension_semantics<parallel>], iteration_bounds = array<i64: 1>, scalar_prefetch = 0 : i64, scratch_operands = 0 : i64, tpu.core_type = #tpu.core_type<tc>, window_params = [{transform_indices = @transform_0, window_bounds = array<i64: 8, 16, 32>}, {pipeline_mode = #tpu.pipeline_mode<synchronous>, transform_indices = @transform_1, window_bounds = array<i64: 32, 168>}, {pipeline_mode = #tpu.pipeline_mode<synchronous>, transform_indices = @transform_2, window_bounds = array<i64: 1, 24>}, {pipeline_mode = #tpu.pipeline_mode<synchronous>, transform_indices = @transform_3, window_bounds = array<i64: 16, 24>}, {transform_indices = @transform_4, window_bounds = array<i64: 8, 24>}]} {
    %c0 = arith.constant 0 : index
    %c0_0 = arith.constant 0 : index
    %c0_1 = arith.constant 0 : index
    %0 = vector.load %arg1[%c0, %c0_0, %c0_1] : memref<8x16x32xf32, #tpu.memory_space<vmem>>, vector<8x16x32xf32>
    %1 = vector.shape_cast %0 : vector<8x16x32xf32> to vector<128x32xf32>
    %c0_2 = arith.constant 0 : index
    %c0_3 = arith.constant 0 : index
    %2 = vector.load %arg2[%c0_2, %c0_3] : memref<32x168xf32, #tpu.memory_space<vmem>>, vector<32x168xf32>
    %cst = arith.constant dense<0.000000e+00> : vector<128x168xf32>
    %3 = tpu.matmul %1, %2, %cst {dimension_numbers = #tpu.dot_dimension_numbers<[1], [0], [0], [1], [0, 0, 1, 1], [], []>} : vector<128x32xf32>, vector<32x168xf32>, vector<128x168xf32> -> vector<128x168xf32>
    %4 = vector.extract_strided_slice %3 {offsets = [0, 0], sizes = [128, 24], strides = [1, 1]} : vector<128x168xf32> to vector<128x24xf32>
    %5 = vector.extract_strided_slice %3 {offsets = [0, 24], sizes = [128, 24], strides = [1, 1]} : vector<128x168xf32> to vector<128x24xf32>
    %6 = vector.extract_strided_slice %5 {offsets = [1, 0], sizes = [127, 24], strides = [1, 1]} : vector<128x24xf32> to vector<127x24xf32>
    %7 = vector.extract_strided_slice %5 {offsets = [0, 0], sizes = [1, 24], strides = [1, 1]} : vector<128x24xf32> to vector<1x24xf32>
    %8 = tpu.concatenate %6, %7 in 0 : vector<127x24xf32>, vector<1x24xf32> -> vector<128x24xf32>
    %9 = arith.addf %4, %8 : vector<128x24xf32>
    %10 = vector.extract_strided_slice %3 {offsets = [0, 48], sizes = [128, 24], strides = [1, 1]} : vector<128x168xf32> to vector<128x24xf32>
    %11 = vector.extract_strided_slice %10 {offsets = [2, 0], sizes = [126, 24], strides = [1, 1]} : vector<128x24xf32> to vector<126x24xf32>
    %12 = vector.extract_strided_slice %10 {offsets = [0, 0], sizes = [2, 24], strides = [1, 1]} : vector<128x24xf32> to vector<2x24xf32>
    %13 = tpu.concatenate %11, %12 in 0 : vector<126x24xf32>, vector<2x24xf32> -> vector<128x24xf32>
    %14 = arith.addf %9, %13 : vector<128x24xf32>
    %15 = vector.extract_strided_slice %3 {offsets = [0, 72], sizes = [128, 24], strides = [1, 1]} : vector<128x168xf32> to vector<128x24xf32>
    %16 = vector.extract_strided_slice %15 {offsets = [3, 0], sizes = [125, 24], strides = [1, 1]} : vector<128x24xf32> to vector<125x24xf32>
    %17 = vector.extract_strided_slice %15 {offsets = [0, 0], sizes = [3, 24], strides = [1, 1]} : vector<128x24xf32> to vector<3x24xf32>
    %18 = tpu.concatenate %16, %17 in 0 : vector<125x24xf32>, vector<3x24xf32> -> vector<128x24xf32>
    %19 = arith.addf %14, %18 : vector<128x24xf32>
    %20 = vector.extract_strided_slice %3 {offsets = [0, 96], sizes = [128, 24], strides = [1, 1]} : vector<128x168xf32> to vector<128x24xf32>
    %21 = vector.extract_strided_slice %20 {offsets = [4, 0], sizes = [124, 24], strides = [1, 1]} : vector<128x24xf32> to vector<124x24xf32>
    %22 = vector.extract_strided_slice %20 {offsets = [0, 0], sizes = [4, 24], strides = [1, 1]} : vector<128x24xf32> to vector<4x24xf32>
    %23 = tpu.concatenate %21, %22 in 0 : vector<124x24xf32>, vector<4x24xf32> -> vector<128x24xf32>
    %24 = arith.addf %19, %23 : vector<128x24xf32>
    %25 = vector.extract_strided_slice %3 {offsets = [0, 120], sizes = [128, 24], strides = [1, 1]} : vector<128x168xf32> to vector<128x24xf32>
    %26 = vector.extract_strided_slice %25 {offsets = [5, 0], sizes = [123, 24], strides = [1, 1]} : vector<128x24xf32> to vector<123x24xf32>
    %27 = vector.extract_strided_slice %25 {offsets = [0, 0], sizes = [5, 24], strides = [1, 1]} : vector<128x24xf32> to vector<5x24xf32>
    %28 = tpu.concatenate %26, %27 in 0 : vector<123x24xf32>, vector<5x24xf32> -> vector<128x24xf32>
    %29 = arith.addf %24, %28 : vector<128x24xf32>
    %30 = vector.extract_strided_slice %3 {offsets = [0, 144], sizes = [128, 24], strides = [1, 1]} : vector<128x168xf32> to vector<128x24xf32>
    %31 = vector.extract_strided_slice %30 {offsets = [6, 0], sizes = [122, 24], strides = [1, 1]} : vector<128x24xf32> to vector<122x24xf32>
    %32 = vector.extract_strided_slice %30 {offsets = [0, 0], sizes = [6, 24], strides = [1, 1]} : vector<128x24xf32> to vector<6x24xf32>
    %33 = tpu.concatenate %31, %32 in 0 : vector<122x24xf32>, vector<6x24xf32> -> vector<128x24xf32>
    %34 = arith.addf %29, %33 : vector<128x24xf32>
    %35 = vector.shape_cast %34 : vector<128x24xf32> to vector<8x16x24xf32>
    %c0_4 = arith.constant 0 : index
    %c0_5 = arith.constant 0 : index
    %36 = vector.load %arg4[%c0_4, %c0_5] : memref<16x24xf32, #tpu.memory_space<vmem>>, vector<16x24xf32>
    %37 = vector.shape_cast %36 : vector<16x24xf32> to vector<1x16x24xf32>
    %38 = vector.broadcast %37 : vector<1x16x24xf32> to vector<8x16x24xf32>
    %39 = arith.addf %35, %38 : vector<8x16x24xf32>
    %cst_6 = arith.constant dense<0xFF800000> : vector<8x24xf32>
    %40 = vector.multi_reduction <maximumf>, %39, %cst_6 [1] : vector<8x16x24xf32> to vector<8x24xf32>
    %c0_7 = arith.constant 0 : index
    %c0_8 = arith.constant 0 : index
    %41 = vector.load %arg3[%c0_7, %c0_8] : memref<1x24xf32, #tpu.memory_space<vmem>>, vector<1x24xf32>
    %42 = vector.broadcast %41 : vector<1x24xf32> to vector<8x24xf32>
    %43 = arith.addf %40, %42 : vector<8x24xf32>
    %cst_9 = arith.constant 0.000000e+00 : f32
    %44 = vector.broadcast %cst_9 : f32 to vector<8x24xf32>
    %45 = arith.maximumf %43, %44 : vector<8x24xf32>
    %c0_10 = arith.constant 0 : index
    %c0_11 = arith.constant 0 : index
    %46 = vector.load %arg5[%c0_10, %c0_11] : memref<8x24xf32, #tpu.memory_space<vmem>>, vector<8x24xf32>
    tpu.vector_store %arg5[%c0_10, %c0_11], %45 {strides = array<i32>} : memref<8x24xf32, #tpu.memory_space<vmem>>, vector<8x24xf32>,
    return
  }
  func.func @transform_0(%arg0: i32) -> (i32, i32, i32) {
    %c0_i32 = arith.constant 0 : i32
    %c0_i32_0 = arith.constant 0 : i32
    %c0_i32_1 = arith.constant 0 : i32
    return %arg0, %c0_i32, %c0_i32_0 : i32, i32, i32
  }
  func.func @transform_1(%arg0: i32) -> (i32, i32) {
    %c0_i32 = arith.constant 0 : i32
    %c0_i32_0 = arith.constant 0 : i32
    %c0_i32_1 = arith.constant 0 : i32
    return %c0_i32, %c0_i32_0 : i32, i32
  }
  func.func @transform_2(%arg0: i32) -> (i32, i32) {
    %c0_i32 = arith.constant 0 : i32
    %c0_i32_0 = arith.constant 0 : i32
    %c0_i32_1 = arith.constant 0 : i32
    return %c0_i32, %c0_i32_0 : i32, i32
  }
  func.func @transform_3(%arg0: i32) -> (i32, i32) {
    %c0_i32 = arith.constant 0 : i32
    %c0_i32_0 = arith.constant 0 : i32
    %c0_i32_1 = arith.constant 0 : i32
    return %c0_i32, %c0_i32_0 : i32, i32
  }
  func.func @transform_4(%arg0: i32) -> (i32, i32) {
    %c0_i32 = arith.constant 0 : i32
    %c0_i32_0 = arith.constant 0 : i32
    return %arg0, %c0_i32 : i32, i32
  }
}

</mosaic_0001>

<llo_original>
// kernel: tpu_custom_call.1
$region0: #{tpu_custom_call.1}
  #allocation0 [shape = 'u32[]', space=smem, size = 0x4, offset = 0x4, fixed_abs, tag = 'smem constant byte address 0x4 - core index']
  #allocation1 [shape = 'u32[144,128]{1,0:T(1,128)}', space=vmem, size = 0x12000, scoped, tag = 'internal scratch']
  %s0 = inlined_call_operand.hbm [shape: f32[8,16,32], index: 0, kind: input, shape index: {}]
  %s1 = inlined_call_operand.hbm [shape: f32[32,168], index: 1, kind: input, shape index: {}]
  %s2 = inlined_call_operand.vmem [shape: f32[1,24], index: 2, kind: input, shape index: {}]
  %s3 = inlined_call_operand.hbm [shape: f32[16,24], index: 3, kind: input, shape index: {}]
  %s4 = inlined_call_operand.hbm [shape: f32[8,24], index: 4, kind: output, shape index: {}]
  %s5 = sld [smem:[#allocation0]]
  $region38: #{tpu_custom_call.1} parent=0
    _
  %s7 = ssub.s32 1, %s5
  %s8 = scalar_select 0, %s7, %s5
  $region1: #{tpu_custom_call.1} parent=0
    #allocation2 [shape = 'u8[65536]{0}', space=vmem, size = 0x10000, scoped, tag = 'input window, operand 0, single buffered']
    #allocation3 [shape = 's32[1]{0}', space=sflag, size = 0x4, scoped, tag = 'scoped memory for tpu_custom_call.1']
    #allocation4 [shape = 's32[1]{0}', space=sflag, size = 0x4, scoped, tag = 'scoped memory for tpu_custom_call.1']
    #allocation5 [shape = 'u8[32768]{0}', space=vmem, size = 0x8000, scoped, tag = 'input window, operand 1, single buffered']
    #allocation6 [shape = 's32[1]{0}', space=sflag, size = 0x4, scoped, tag = 'scoped memory for tpu_custom_call.1']
    #allocation7 [shape = 'u8[8192]{0}', space=vmem, size = 0x2000, scoped, tag = 'input window, operand 3, single buffered']
    #allocation8 [shape = 'u8[4096]{0}', space=vmem, size = 0x1000, scoped, tag = 'output window, operand 0, single buffered']
    %9 = vsyncpa [#allocation3], 0
    %10 = vsyncpa [#allocation6], 0
    %11 = vsyncpa [#allocation4], 0
    // Predicated region
    $region2: #{tpu_custom_call.1} parent=1 // pred_check
      _
    $region3: #{tpu_custom_call.1} parent=1 // pred_check_branch
      %13 = sbr.rel (0) target = $region5
    $region4: #{tpu_custom_call.1} parent=1 // pred_region
      %s15 = ssub.s32 2048, 2048
      %16 = vsyncadd [#allocation3], %s15
      %s17 = sshll.u32 [#allocation2], 4
      %s18 = int_to_ptr.vmem [resolvable:$true] %s17
      %23 = dma.hbm_to_vmem [thread:$0]  %s0, 2048, %s18, [#allocation3], 128, 128, 8
    $region5: #{tpu_custom_call.1} parent=1 // pred_fallthru
      _
    // Predicated region
    $region6: #{tpu_custom_call.1} parent=1 // pred_check
      _
    $region7: #{tpu_custom_call.1} parent=1 // pred_check_branch
      %25 = sbr.rel (0) target = $region9
    $region8: #{tpu_custom_call.1} parent=1 // pred_region
      %s27 = ssub.s32 1024, 1024
      %28 = vsyncadd [#allocation6], %s27
      %s29 = sshll.u32 [#allocation5], 4
      %s30 = int_to_ptr.vmem [resolvable:$true] %s29
      %35 = dma.hbm_to_vmem [thread:$0]  %s1, 1024, %s30, [#allocation6], 256, 256, 16
    $region9: #{tpu_custom_call.1} parent=1 // pred_fallthru
      _
    // Predicated region
    $region10: #{tpu_custom_call.1} parent=1 // pred_check
      _
    $region11: #{tpu_custom_call.1} parent=1 // pred_check_branch
      %37 = sbr.rel (0) target = $region13
    $region12: #{tpu_custom_call.1} parent=1 // pred_region
      _
    $region13: #{tpu_custom_call.1} parent=1 // pred_fallthru
      _
    // Predicated region
    $region14: #{tpu_custom_call.1} parent=1 // pred_check
      _
    $region15: #{tpu_custom_call.1} parent=1 // pred_check_branch
      %39 = sbr.rel (0) target = $region17
    $region16: #{tpu_custom_call.1} parent=1 // pred_region
      %s41 = ssub.s32 256, 256
      %42 = vsyncadd [#allocation6], %s41
      %s43 = sshll.u32 [#allocation7], 4
      %s44 = int_to_ptr.vmem [resolvable:$true] %s43
      %49 = dma.hbm_to_vmem [thread:$0]  %s3, 256, %s44, [#allocation6], 128, 128, 8
    $region17: #{tpu_custom_call.1} parent=1 // pred_fallthru
      _
    // Predicated region
    $region18: #{tpu_custom_call.1} parent=1 // pred_check
      _
    $region19: #{tpu_custom_call.1} parent=1 // pred_check_branch
      %51 = sbr.rel (0) target = $region21
    $region20: #{tpu_custom_call.1} parent=1 // pred_region
      %52 = dma.done [#allocation3], 2048
    $region21: #{tpu_custom_call.1} parent=1 // pred_fallthru
      _
    // Predicated region
    $region22: #{tpu_custom_call.1} parent=1 // pred_check
      _
    $region23: #{tpu_custom_call.1} parent=1 // pred_check_branch
      %54 = sbr.rel (0) target = $region25
    $region24: #{tpu_custom_call.1} parent=1 // pred_region
      %55 = dma.done [#allocation6], 1024
    $region25: #{tpu_custom_call.1} parent=1 // pred_fallthru
      _
    // Predicated region
    $region26: #{tpu_custom_call.1} parent=1 // pred_check
      _
    $region27: #{tpu_custom_call.1} parent=1 // pred_check_branch
      %57 = sbr.rel (0) target = $region29
    $region28: #{tpu_custom_call.1} parent=1 // pred_region
      %58 = dma.done [#allocation6], 256
    $region29: #{tpu_custom_call.1} parent=1 // pred_fallthru
      _
    %v59 = vld [vmem:[#allocation2] sm:$0xff]
    %v60 = vld [vmem:[#allocation2 + $0x8] sm:$0xff]
    %v61 = vld [vmem:[#allocation2 + $0x10] sm:$0xff]
    %v62 = vld [vmem:[#allocation2 + $0x18] sm:$0xff]
    %v63 = vld [vmem:[#allocation2 + $0x20] sm:$0xff]
    %v64 = vld [vmem:[#allocation2 + $0x28] sm:$0xff]
    %v65 = vld [vmem:[#allocation2 + $0x30] sm:$0xff]
    %v66 = vld [vmem:[#allocation2 + $0x38] sm:$0xff]
    %v67 = vld [vmem:[#allocation2 + $0x40] sm:$0xff]
    %v68 = vld [vmem:[#allocation2 + $0x48] sm:$0xff]
    %v69 = vld [vmem:[#allocation2 + $0x50] sm:$0xff]
    %v70 = vld [vmem:[#allocation2 + $0x58] sm:$0xff]
    %v71 = vld [vmem:[#allocation2 + $0x60] sm:$0xff]
    %v72 = vld [vmem:[#allocation2 + $0x68] sm:$0xff]
    %v73 = vld [vmem:[#allocation2 + $0x70] sm:$0xff]
    %v74 = vld [vmem:[#allocation2 + $0x78] sm:$0xff]
    %v75 = vld [vmem:[#allocation5] sm:$0xff]
    %v76 = vld [vmem:[#allocation5 + $0x8] sm:$0xff]
    %v77 = vld [vmem:[#allocation5 + $0x10] sm:$0xff]
    %v78 = vld [vmem:[#allocation5 + $0x18] sm:$0xff]
    %v79 = vld [vmem:[#allocation5 + $0x20] sm:$0xff]
    %v80 = vld [vmem:[#allocation5 + $0x28] sm:$0xff]
    %v81 = vld [vmem:[#allocation5 + $0x30] sm:$0xff]
    %v82 = vld [vmem:[#allocation5 + $0x38] sm:$0xff]
    %vm83 = vcmask 261120
    %v85 = vsel %vm83, %v59, 0
    %v88 = vsel %vm83, %v60, 0
    %v91 = vsel %vm83, %v61, 0
    %v94 = vsel %vm83, %v62, 0
    %v97 = vsel %vm83, %v63, 0
    %v100 = vsel %vm83, %v64, 0
    %v103 = vsel %vm83, %v65, 0
    %v106 = vsel %vm83, %v66, 0
    %v109 = vsel %vm83, %v67, 0
    %v112 = vsel %vm83, %v68, 0
    %v115 = vsel %vm83, %v69, 0
    %v118 = vsel %vm83, %v70, 0
    %v121 = vsel %vm83, %v71, 0
    %v124 = vsel %vm83, %v72, 0
    %v127 = vsel %vm83, %v73, 0
    %v130 = vsel %vm83, %v74, 0
    %132 = vmatprep.subr.mxu0 %v76
    %133 = vmatpush1.msra.mxu0 %v75
    %134 = vmatprep.subr.mxu0 %v78
    %135 = vmatpush1.msra.mxu0 %v77
    %136 = vmatprep.subr.mxu0 %v80
    %137 = vmatpush1.msra.mxu0 %v79
    %138 = vmatprep.subr.mxu0 %v82
    %139 = vmatpush1.msra.mxu0 %v81
    %140 = vmatprep.subr.mxu0 0.0
    %141 = vmatpush1.msra.mxu0 0.0
    %142 = vmatprep.subr.mxu0 0.0
    %143 = vmatpush1.msra.mxu0 0.0
    %144 = vmatprep.subr.mxu0 0.0
    %145 = vmatpush1.msra.mxu0 0.0
    %146 = vmatprep.subr.mxu0 0.0
    %147 = vmatpush1.msra.mxu0 0.0
    %148 = vmatprep.subr.mxu0 0.0
    %149 = vmatpush1.msra.mxu0 0.0
    %150 = vmatprep.subr.mxu0 0.0
    %151 = vmatpush1.msra.mxu0 0.0
    %152 = vmatprep.subr.mxu0 0.0
    %153 = vmatpush1.msra.mxu0 0.0
    %154 = vmatprep.subr.mxu0 0.0
    %155 = vmatpush1.msra.mxu0 0.0
    %156 = vmatprep.subr.mxu0 0.0
    %157 = vmatpush1.msra.mxu0 0.0
    %158 = vmatprep.subr.mxu0 0.0
    %159 = vmatpush1.msra.mxu0 0.0
    %160 = vmatprep.subr.mxu0 0.0
    %161 = vmatpush1.msra.mxu0 0.0
    %162 = vmatprep.subr.mxu0 0.0
    %163 = vmatpush1.msra.mxu0 0.0
    %164 = vmatprep.subr.mxu0 0.0
    %165 = vmatpush1.msra.mxu0 0.0
    %166 = vmatprep.subr.mxu0 0.0
    %167 = vmatpush1.msra.mxu0 0.0
    %168 = vmatprep.subr.mxu0 0.0
    %169 = vmatpush1.msra.mxu0 0.0
    %170 = vmatprep.subr.mxu0 0.0
    %171 = vmatpush1.msra.mxu0 0.0
    %172 = vmatprep.subr.mxu0 0.0
    %173 = vmatpush1.msra.mxu0 0.0
    %174 = vmatprep.subr.mxu0 0.0
    %175 = vmatpush1.msra.mxu0 0.0
    %176 = vmatprep.subr.mxu0 0.0
    %177 = vmatpush1.msra.mxu0 0.0
    %178 = vmatprep.subr.mxu0 0.0
    %179 = vmatpush1.msra.mxu0 0.0
    %180 = vmatprep.subr.mxu0 0.0
    %181 = vmatpush1.msra.mxu0 0.0
    %182 = vmatprep.subr.mxu0 0.0
    %183 = vmatpush1.msra.mxu0 0.0
    %184 = vmatprep.subr.mxu0 0.0
    %185 = vmatpush1.msra.mxu0 0.0
    %186 = vmatprep.subr.mxu0 0.0
    %187 = vmatpush1.msra.mxu0 0.0
    %188 = vmatprep.subr.mxu0 0.0
    %189 = vmatpush1.msra.mxu0 0.0
    %190 = vmatprep.subr.mxu0 0.0
    %191 = vmatpush1.msra.mxu0 0.0
    %192 = vmatprep.subr.mxu0 0.0
    %193 = vmatpush1.msra.mxu0 0.0
    %194 = vmatprep.subr.mxu0 0.0
    %195 = vmatpush1.msra.mxu0 0.0
    %196 = vmatprep.mubr.f32.mxu0 0.0
    %197 = vmatmul.mubr.f32.gmra.mrb[0].mxu0 %v85
    %v198 = vpop.f32.mrb[0].mxu0
    %v199 = vadd.f32 0.0, %v198
    %v200 = vpop.f32.mrb[0].mxu0
    %v201 = vadd.f32 0.0, %v200
    %202 = vmatprep.mubr.f32.mxu0 0.0
    %203 = vmatmul.mubr.f32.gmra.mrb[0].mxu0 %v88
    %v204 = vpop.f32.mrb[0].mxu0
    %v205 = vadd.f32 0.0, %v204
    %v206 = vpop.f32.mrb[0].mxu0
    %v207 = vadd.f32 0.0, %v206
    %208 = vmatprep.mubr.f32.mxu0 0.0
    %209 = vmatmul.mubr.f32.gmra.mrb[0].mxu0 %v91
    %v210 = vpop.f32.mrb[0].mxu0
    %v211 = vadd.f32 0.0, %v210
    %v212 = vpop.f32.mrb[0].mxu0
    %v213 = vadd.f32 0.0, %v212
    %214 = vmatprep.mubr.f32.mxu0 0.0
    %215 = vmatmul.mubr.f32.gmra.mrb[0].mxu0 %v94
    %v216 = vpop.f32.mrb[0].mxu0
    %v217 = vadd.f32 0.0, %v216
    %v218 = vpop.f32.mrb[0].mxu0
    %v219 = vadd.f32 0.0, %v218
    %220 = vmatprep.mubr.f32.mxu0 0.0
    %221 = vmatmul.mubr.f32.gmra.mrb[0].mxu0 %v97
    %v222 = vpop.f32.mrb[0].mxu0
    %v223 = vadd.f32 0.0, %v222
    %v224 = vpop.f32.mrb[0].mxu0
    %v225 = vadd.f32 0.0, %v224
    %226 = vmatprep.mubr.f32.mxu0 0.0
    %227 = vmatmul.mubr.f32.gmra.mrb[0].mxu0 %v100
    %v228 = vpop.f32.mrb[0].mxu0
    %v229 = vadd.f32 0.0, %v228
    %v230 = vpop.f32.mrb[0].mxu0
    %v231 = vadd.f32 0.0, %v230
    %232 = vmatprep.mubr.f32.mxu0 0.0
    %233 = vmatmul.mubr.f32.gmra.mrb[0].mxu0 %v103
    %v234 = vpop.f32.mrb[0].mxu0
    %v235 = vadd.f32 0.0, %v234
    %v236 = vpop.f32.mrb[0].mxu0
    %v237 = vadd.f32 0.0, %v236
    %238 = vmatprep.mubr.f32.mxu0 0.0
    %239 = vmatmul.mubr.f32.gmra.mrb[0].mxu0 %v106
    %v240 = vpop.f32.mrb[0].mxu0
    %v241 = vadd.f32 0.0, %v240
    %v242 = vpop.f32.mrb[0].mxu0
    %v243 = vadd.f32 0.0, %v242
    %244 = vmatprep.mubr.f32.mxu0 0.0
    %245 = vmatmul.mubr.f32.gmra.mrb[0].mxu0 %v109
    %v246 = vpop.f32.mrb[0].mxu0
    %v247 = vadd.f32 0.0, %v246
    %v248 = vpop.f32.mrb[0].mxu0
    %v249 = vadd.f32 0.0, %v248
    %250 = vmatprep.mubr.f32.mxu0 0.0
    %251 = vmatmul.mubr.f32.gmra.mrb[0].mxu0 %v112
    %v252 = vpop.f32.mrb[0].mxu0
    %v253 = vadd.f32 0.0, %v252
    %v254 = vpop.f32.mrb[0].mxu0
    %v255 = vadd.f32 0.0, %v254
    %256 = vmatprep.mubr.f32.mxu0 0.0
    %257 = vmatmul.mubr.f32.gmra.mrb[0].mxu0 %v115
    %v258 = vpop.f32.mrb[0].mxu0
    %v259 = vadd.f32 0.0, %v258
    %v260 = vpop.f32.mrb[0].mxu0
    %v261 = vadd.f32 0.0, %v260
    %262 = vmatprep.mubr.f32.mxu0 0.0
    %263 = vmatmul.mubr.f32.gmra.mrb[0].mxu0 %v118
    %v264 = vpop.f32.mrb[0].mxu0
    %v265 = vadd.f32 0.0, %v264
    %v266 = vpop.f32.mrb[0].mxu0
    %v267 = vadd.f32 0.0, %v266
    %268 = vmatprep.mubr.f32.mxu0 0.0
    %269 = vmatmul.mubr.f32.gmra.mrb[0].mxu0 %v121
    %v270 = vpop.f32.mrb[0].mxu0
    %v271 = vadd.f32 0.0, %v270
    %v272 = vpop.f32.mrb[0].mxu0
    %v273 = vadd.f32 0.0, %v272
    %274 = vmatprep.mubr.f32.mxu0 0.0
    %275 = vmatmul.mubr.f32.gmra.mrb[0].mxu0 %v124
    %v276 = vpop.f32.mrb[0].mxu0
    %v277 = vadd.f32 0.0, %v276
    %v278 = vpop.f32.mrb[0].mxu0
    %v279 = vadd.f32 0.0, %v278
    %280 = vmatprep.mubr.f32.mxu0 0.0
    %281 = vmatmul.mubr.f32.gmra.mrb[0].mxu0 %v127
    %v282 = vpop.f32.mrb[0].mxu0
    %v283 = vadd.f32 0.0, %v282
    %v284 = vpop.f32.mrb[0].mxu0
    %v285 = vadd.f32 0.0, %v284
    %286 = vmatprep.mubr.f32.mxu0 0.0
    %287 = vmatmul.mubr.f32.gmra.mrb[0].mxu0 %v130
    %v288 = vpop.f32.mrb[0].mxu0
    %v289 = vadd.f32 0.0, %v288
    %v290 = vpop.f32.mrb[0].mxu0
    %v291 = vadd.f32 0.0, %v290
    %292 = vdwg.mxu0
    %vm309 = vcmask 1046528
    %v310 = vrot.slane %v199, 1
    %v311 = vrot.slane %v205, 1
    %v312 = vsel %vm309, %v310, %v311
    %v313 = vrot.slane %v211, 1
    %v314 = vsel %vm309, %v311, %v313
    %v315 = vrot.slane %v217, 1
    %v316 = vsel %vm309, %v313, %v315
    %v317 = vrot.slane %v223, 1
    %v318 = vsel %vm309, %v315, %v317
    %v319 = vrot.slane %v229, 1
    %v320 = vsel %vm309, %v317, %v319
    %v321 = vrot.slane %v235, 1
    %v322 = vsel %vm309, %v319, %v321
    %v323 = vrot.slane %v241, 1
    %v324 = vsel %vm309, %v321, %v323
    %v325 = vrot.slane %v247, 1
    %v326 = vsel %vm309, %v323, %v325
    %v327 = vrot.slane %v253, 1
    %v328 = vsel %vm309, %v325, %v327
    %v329 = vrot.slane %v259, 1
    %v330 = vsel %vm309, %v327, %v329
    %v331 = vrot.slane %v265, 1
    %v332 = vsel %vm309, %v329, %v331
    %v333 = vrot.slane %v271, 1
    %v334 = vsel %vm309, %v331, %v333
    %v335 = vrot.slane %v277, 1
    %v336 = vsel %vm309, %v333, %v335
    %v337 = vrot.slane %v283, 1
    %v338 = vsel %vm309, %v335, %v337
    %v339 = vrot.slane %v289, 1
    %v340 = vsel %vm309, %v337, %v339
    %v343 = vsel %vm309, %v339, %v310
    %345 = vrot.lane.b32.xlu0 %v312, 104
    %v346 = vpop.permute.xlu0 %345
    %347 = vrot.lane.b32.xlu0 %v314, 104
    %v348 = vpop.permute.xlu0 %347
    %349 = vrot.lane.b32.xlu0 %v316, 104
    %v350 = vpop.permute.xlu0 %349
    %351 = vrot.lane.b32.xlu0 %v318, 104
    %v352 = vpop.permute.xlu0 %351
    %353 = vrot.lane.b32.xlu0 %v320, 104
    %v354 = vpop.permute.xlu0 %353
    %355 = vrot.lane.b32.xlu0 %v322, 104
    %v356 = vpop.permute.xlu0 %355
    %357 = vrot.lane.b32.xlu0 %v324, 104
    %v358 = vpop.permute.xlu0 %357
    %359 = vrot.lane.b32.xlu0 %v326, 104
    %v360 = vpop.permute.xlu0 %359
    %361 = vrot.lane.b32.xlu0 %v328, 104
    %v362 = vpop.permute.xlu0 %361
    %363 = vrot.lane.b32.xlu0 %v330, 104
    %v364 = vpop.permute.xlu0 %363
    %365 = vrot.lane.b32.xlu0 %v332, 104
    %v366 = vpop.permute.xlu0 %365
    %367 = vrot.lane.b32.xlu0 %v334, 104
    %v368 = vpop.permute.xlu0 %367
    %369 = vrot.lane.b32.xlu0 %v336, 104
    %v370 = vpop.permute.xlu0 %369
    %371 = vrot.lane.b32.xlu0 %v338, 104
    %v372 = vpop.permute.xlu0 %371
    %373 = vrot.lane.b32.xlu0 %v340, 104
    %v374 = vpop.permute.xlu0 %373
    %375 = vrot.lane.b32.xlu0 %v343, 104
    %v376 = vpop.permute.xlu0 %375
    %v393 = vadd.f32 %v199, %v346
    %v394 = vadd.f32 %v205, %v348
    %v395 = vadd.f32 %v211, %v350
    %v396 = vadd.f32 %v217, %v352
    %v397 = vadd.f32 %v223, %v354
    %v398 = vadd.f32 %v229, %v356
    %v399 = vadd.f32 %v235, %v358
    %v400 = vadd.f32 %v241, %v360
    %v401 = vadd.f32 %v247, %v362
    %v402 = vadd.f32 %v253, %v364
    %v403 = vadd.f32 %v259, %v366
    %v404 = vadd.f32 %v265, %v368
    %v405 = vadd.f32 %v271, %v370
    %v406 = vadd.f32 %v277, %v372
    %v407 = vadd.f32 %v283, %v374
    %v408 = vadd.f32 %v289, %v376
    %vm409 = vcmask 1045504
    %v410 = vrot.slane %v199, 2
    %v411 = vrot.slane %v205, 2
    %v412 = vsel %vm409, %v410, %v411
    %v413 = vrot.slane %v211, 2
    %v414 = vsel %vm409, %v411, %v413
    %v415 = vrot.slane %v217, 2
    %v416 = vsel %vm409, %v413, %v415
    %v417 = vrot.slane %v223, 2
    %v418 = vsel %vm409, %v415, %v417
    %v419 = vrot.slane %v229, 2
    %v420 = vsel %vm409, %v417, %v419
    %v421 = vrot.slane %v235, 2
    %v422 = vsel %vm409, %v419, %v421
    %v423 = vrot.slane %v241, 2
    %v424 = vsel %vm409, %v421, %v423
    %v425 = vrot.slane %v247, 2
    %v426 = vsel %vm409, %v423, %v425
    %v427 = vrot.slane %v253, 2
    %v428 = vsel %vm409, %v425, %v427
    %v429 = vrot.slane %v259, 2
    %v430 = vsel %vm409, %v427, %v429
    %v431 = vrot.slane %v265, 2
    %v432 = vsel %vm409, %v429, %v431
    %v433 = vrot.slane %v271, 2
    %v434 = vsel %vm409, %v431, %v433
    %v435 = vrot.slane %v277, 2
    %v436 = vsel %vm409, %v433, %v435
    %v437 = vrot.slane %v283, 2
    %v438 = vsel %vm409, %v435, %v437
    %v439 = vrot.slane %v289, 2
    %v440 = vsel %vm409, %v437, %v439
    %v443 = vsel %vm409, %v439, %v410
    %445 = vrot.lane.b32.xlu0 %v412, 80
    %v446 = vpop.permute.xlu0 %445
    %447 = vrot.lane.b32.xlu0 %v414, 80
    %v448 = vpop.permute.xlu0 %447
    %449 = vrot.lane.b32.xlu0 %v416, 80
    %v450 = vpop.permute.xlu0 %449
    %451 = vrot.lane.b32.xlu0 %v418, 80
    %v452 = vpop.permute.xlu0 %451
    %453 = vrot.lane.b32.xlu0 %v420, 80
    %v454 = vpop.permute.xlu0 %453
    %455 = vrot.lane.b32.xlu0 %v422, 80
    %v456 = vpop.permute.xlu0 %455
    %457 = vrot.lane.b32.xlu0 %v424, 80
    %v458 = vpop.permute.xlu0 %457
    %459 = vrot.lane.b32.xlu0 %v426, 80
    %v460 = vpop.permute.xlu0 %459
    %461 = vrot.lane.b32.xlu0 %v428, 80
    %v462 = vpop.permute.xlu0 %461
    %463 = vrot.lane.b32.xlu0 %v430, 80
    %v464 = vpop.permute.xlu0 %463
    %465 = vrot.lane.b32.xlu0 %v432, 80
    %v466 = vpop.permute.xlu0 %465
    %467 = vrot.lane.b32.xlu0 %v434, 80
    %v468 = vpop.permute.xlu0 %467
    %469 = vrot.lane.b32.xlu0 %v436, 80
    %v470 = vpop.permute.xlu0 %469
    %471 = vrot.lane.b32.xlu0 %v438, 80
    %v472 = vpop.permute.xlu0 %471
    %473 = vrot.lane.b32.xlu0 %v440, 80
    %v474 = vpop.permute.xlu0 %473
    %475 = vrot.lane.b32.xlu0 %v443, 80
    %v476 = vpop.permute.xlu0 %475
    %v493 = vadd.f32 %v393, %v446
    %v494 = vadd.f32 %v394, %v448
    %v495 = vadd.f32 %v395, %v450
    %v496 = vadd.f32 %v396, %v452
    %v497 = vadd.f32 %v397, %v454
    %v498 = vadd.f32 %v398, %v456
    %v499 = vadd.f32 %v399, %v458
    %v500 = vadd.f32 %v400, %v460
    %v501 = vadd.f32 %v401, %v462
    %v502 = vadd.f32 %v402, %v464
    %v503 = vadd.f32 %v403, %v466
    %v504 = vadd.f32 %v404, %v468
    %v505 = vadd.f32 %v405, %v470
    %v506 = vadd.f32 %v406, %v472
    %v507 = vadd.f32 %v407, %v474
    %v508 = vadd.f32 %v408, %v476
    %vm509 = vcmask 1044480
    %v510 = vrot.slane %v199, 3
    %v511 = vrot.slane %v205, 3
    %v512 = vsel %vm509, %v510, %v511
    %v513 = vrot.slane %v211, 3
    %v514 = vsel %vm509, %v511, %v513
    %v515 = vrot.slane %v217, 3
    %v516 = vsel %vm509, %v513, %v515
    %v517 = vrot.slane %v223, 3
    %v518 = vsel %vm509, %v515, %v517
    %v519 = vrot.slane %v229, 3
    %v520 = vsel %vm509, %v517, %v519
    %v521 = vrot.slane %v235, 3
    %v522 = vsel %vm509, %v519, %v521
    %v523 = vrot.slane %v241, 3
    %v524 = vsel %vm509, %v521, %v523
    %v525 = vrot.slane %v247, 3
    %v526 = vsel %vm509, %v523, %v525
    %v527 = vrot.slane %v253, 3
    %v528 = vsel %vm509, %v525, %v527
    %v529 = vrot.slane %v259, 3
    %v530 = vsel %vm509, %v527, %v529
    %v531 = vrot.slane %v265, 3
    %v532 = vsel %vm509, %v529, %v531
    %v533 = vrot.slane %v271, 3
    %v534 = vsel %vm509, %v531, %v533
    %v535 = vrot.slane %v277, 3
    %v536 = vsel %vm509, %v533, %v535
    %v537 = vrot.slane %v283, 3
    %v538 = vsel %vm509, %v535, %v537
    %v539 = vrot.slane %v289, 3
    %v540 = vsel %vm509, %v537, %v539
    %v543 = vsel %vm509, %v539, %v510
    %545 = vrot.lane.b32.xlu0 %v512, 56
    %v546 = vpop.permute.xlu0 %545
    %547 = vrot.lane.b32.xlu0 %v514, 56
    %v548 = vpop.permute.xlu0 %547
    %549 = vrot.lane.b32.xlu0 %v516, 56
    %v550 = vpop.permute.xlu0 %549
    %551 = vrot.lane.b32.xlu0 %v518, 56
    %v552 = vpop.permute.xlu0 %551
    %553 = vrot.lane.b32.xlu0 %v520, 56
    %v554 = vpop.permute.xlu0 %553
    %555 = vrot.lane.b32.xlu0 %v522, 56
    %v556 = vpop.permute.xlu0 %555
    %557 = vrot.lane.b32.xlu0 %v524, 56
    %v558 = vpop.permute.xlu0 %557
    %559 = vrot.lane.b32.xlu0 %v526, 56
    %v560 = vpop.permute.xlu0 %559
    %561 = vrot.lane.b32.xlu0 %v528, 56
    %v562 = vpop.permute.xlu0 %561
    %563 = vrot.lane.b32.xlu0 %v530, 56
    %v564 = vpop.permute.xlu0 %563
    %565 = vrot.lane.b32.xlu0 %v532, 56
    %v566 = vpop.permute.xlu0 %565
    %567 = vrot.lane.b32.xlu0 %v534, 56
    %v568 = vpop.permute.xlu0 %567
    %569 = vrot.lane.b32.xlu0 %v536, 56
    %v570 = vpop.permute.xlu0 %569
    %571 = vrot.lane.b32.xlu0 %v538, 56
    %v572 = vpop.permute.xlu0 %571
    %573 = vrot.lane.b32.xlu0 %v540, 56
    %v574 = vpop.permute.xlu0 %573
    %575 = vrot.lane.b32.xlu0 %v543, 56
    %v576 = vpop.permute.xlu0 %575
    %v593 = vadd.f32 %v493, %v546
    %v594 = vadd.f32 %v494, %v548
    %v595 = vadd.f32 %v495, %v550
    %v596 = vadd.f32 %v496, %v552
    %v597 = vadd.f32 %v497, %v554
    %v598 = vadd.f32 %v498, %v556
    %v599 = vadd.f32 %v499, %v558
    %v600 = vadd.f32 %v500, %v560
    %v601 = vadd.f32 %v501, %v562
    %v602 = vadd.f32 %v502, %v564
    %v603 = vadd.f32 %v503, %v566
    %v604 = vadd.f32 %v504, %v568
    %v605 = vadd.f32 %v505, %v570
    %v606 = vadd.f32 %v506, %v572
    %v607 = vadd.f32 %v507, %v574
    %v608 = vadd.f32 %v508, %v576
    %vm609 = vcmask 1043456
    %v610 = vrot.slane %v199, 4
    %v611 = vrot.slane %v205, 4
    %v612 = vsel %vm609, %v610, %v611
    %v613 = vrot.slane %v211, 4
    %v614 = vsel %vm609, %v611, %v613
    %v615 = vrot.slane %v217, 4
    %v616 = vsel %vm609, %v613, %v615
    %v617 = vrot.slane %v223, 4
    %v618 = vsel %vm609, %v615, %v617
    %v619 = vrot.slane %v229, 4
    %v620 = vsel %vm609, %v617, %v619
    %v621 = vrot.slane %v235, 4
    %v622 = vsel %vm609, %v619, %v621
    %v623 = vrot.slane %v241, 4
    %v624 = vsel %vm609, %v621, %v623
    %v625 = vrot.slane %v247, 4
    %v626 = vsel %vm609, %v623, %v625
    %v627 = vrot.slane %v253, 4
    %v628 = vsel %vm609, %v625, %v627
    %v629 = vrot.slane %v259, 4
    %v630 = vsel %vm609, %v627, %v629
    %v631 = vrot.slane %v265, 4
    %v632 = vsel %vm609, %v629, %v631
    %v633 = vrot.slane %v271, 4
    %v634 = vsel %vm609, %v631, %v633
    %v635 = vrot.slane %v277, 4
    %v636 = vsel %vm609, %v633, %v635
    %v637 = vrot.slane %v283, 4
    %v638 = vsel %vm609, %v635, %v637
    %v639 = vrot.slane %v289, 4
    %v640 = vsel %vm609, %v637, %v639
    %v643 = vsel %vm609, %v639, %v610
    %645 = vrot.lane.b32.xlu0 %v612, 32
    %v646 = vpop.permute.xlu0 %645
    %647 = vrot.lane.b32.xlu0 %v614, 32
    %v648 = vpop.permute.xlu0 %647
    %649 = vrot.lane.b32.xlu0 %v616, 32
    %v650 = vpop.permute.xlu0 %649
    %651 = vrot.lane.b32.xlu0 %v618, 32
    %v652 = vpop.permute.xlu0 %651
    %653 = vrot.lane.b32.xlu0 %v620, 32
    %v654 = vpop.permute.xlu0 %653
    %655 = vrot.lane.b32.xlu0 %v622, 32
    %v656 = vpop.permute.xlu0 %655
    %657 = vrot.lane.b32.xlu0 %v624, 32
    %v658 = vpop.permute.xlu0 %657
    %659 = vrot.lane.b32.xlu0 %v626, 32
    %v660 = vpop.permute.xlu0 %659
    %661 = vrot.lane.b32.xlu0 %v628, 32
    %v662 = vpop.permute.xlu0 %661
    %663 = vrot.lane.b32.xlu0 %v630, 32
    %v664 = vpop.permute.xlu0 %663
    %665 = vrot.lane.b32.xlu0 %v632, 32
    %v666 = vpop.permute.xlu0 %665
    %667 = vrot.lane.b32.xlu0 %v634, 32
    %v668 = vpop.permute.xlu0 %667
    %669 = vrot.lane.b32.xlu0 %v636, 32
    %v670 = vpop.permute.xlu0 %669
    %671 = vrot.lane.b32.xlu0 %v638, 32
    %v672 = vpop.permute.xlu0 %671
    %673 = vrot.lane.b32.xlu0 %v640, 32
    %v674 = vpop.permute.xlu0 %673
    %675 = vrot.lane.b32.xlu0 %v643, 32
    %v676 = vpop.permute.xlu0 %675
    %v693 = vadd.f32 %v593, %v646
    %v694 = vadd.f32 %v594, %v648
    %v695 = vadd.f32 %v595, %v650
    %v696 = vadd.f32 %v596, %v652
    %v697 = vadd.f32 %v597, %v654
    %v698 = vadd.f32 %v598, %v656
    %v699 = vadd.f32 %v599, %v658
    %v700 = vadd.f32 %v600, %v660
    %v701 = vadd.f32 %v601, %v662
    %v702 = vadd.f32 %v602, %v664
    %v703 = vadd.f32 %v603, %v666
    %v704 = vadd.f32 %v604, %v668
    %v705 = vadd.f32 %v605, %v670
    %v706 = vadd.f32 %v606, %v672
    %v707 = vadd.f32 %v607, %v674
    %v708 = vadd.f32 %v608, %v676
    %vm725 = vcmask 1042432
    %v726 = vrot.slane %v199, 5
    %v727 = vrot.slane %v205, 5
    %v728 = vsel %vm725, %v726, %v727
    %v729 = vrot.slane %v201, 5
    %v730 = vrot.slane %v207, 5
    %v731 = vsel %vm725, %v729, %v730
    %v732 = vrot.slane %v211, 5
    %v733 = vsel %vm725, %v727, %v732
    %v734 = vrot.slane %v213, 5
    %v735 = vsel %vm725, %v730, %v734
    %v736 = vrot.slane %v217, 5
    %v737 = vsel %vm725, %v732, %v736
    %v738 = vrot.slane %v219, 5
    %v739 = vsel %vm725, %v734, %v738
    %v740 = vrot.slane %v223, 5
    %v741 = vsel %vm725, %v736, %v740
    %v742 = vrot.slane %v225, 5
    %v743 = vsel %vm725, %v738, %v742
    %v744 = vrot.slane %v229, 5
    %v745 = vsel %vm725, %v740, %v744
    %v746 = vrot.slane %v231, 5
    %v747 = vsel %vm725, %v742, %v746
    %v748 = vrot.slane %v235, 5
    %v749 = vsel %vm725, %v744, %v748
    %v750 = vrot.slane %v237, 5
    %v751 = vsel %vm725, %v746, %v750
    %v752 = vrot.slane %v241, 5
    %v753 = vsel %vm725, %v748, %v752
    %v754 = vrot.slane %v243, 5
    %v755 = vsel %vm725, %v750, %v754
    %v756 = vrot.slane %v247, 5
    %v757 = vsel %vm725, %v752, %v756
    %v758 = vrot.slane %v249, 5
    %v759 = vsel %vm725, %v754, %v758
    %v760 = vrot.slane %v253, 5
    %v761 = vsel %vm725, %v756, %v760
    %v762 = vrot.slane %v255, 5
    %v763 = vsel %vm725, %v758, %v762
    %v764 = vrot.slane %v259, 5
    %v765 = vsel %vm725, %v760, %v764
    %v766 = vrot.slane %v261, 5
    %v767 = vsel %vm725, %v762, %v766
    %v768 = vrot.slane %v265, 5
    %v769 = vsel %vm725, %v764, %v768
    %v770 = vrot.slane %v267, 5
    %v771 = vsel %vm725, %v766, %v770
    %v772 = vrot.slane %v271, 5
    %v773 = vsel %vm725, %v768, %v772
    %v774 = vrot.slane %v273, 5
    %v775 = vsel %vm725, %v770, %v774
    %v776 = vrot.slane %v277, 5
    %v777 = vsel %vm725, %v772, %v776
    %v778 = vrot.slane %v279, 5
    %v779 = vsel %vm725, %v774, %v778
    %v780 = vrot.slane %v283, 5
    %v781 = vsel %vm725, %v776, %v780
    %v782 = vrot.slane %v285, 5
    %v783 = vsel %vm725, %v778, %v782
    %v784 = vrot.slane %v289, 5
    %v785 = vsel %vm725, %v780, %v784
    %v786 = vrot.slane %v291, 5
    %v787 = vsel %vm725, %v782, %v786
    %v792 = vsel %vm725, %v784, %v726
    %v793 = vsel %vm725, %v786, %v729
    %796 = vrot.lane.b32.xlu0 %v728, 8
    %v797 = vpop.permute.xlu0 %796
    %798 = vrot.lane.b32.xlu0 %v731, 8
    %v799 = vpop.permute.xlu0 %798
    %800 = vrot.lane.b32.xlu0 %v733, 8
    %v801 = vpop.permute.xlu0 %800
    %802 = vrot.lane.b32.xlu0 %v735, 8
    %v803 = vpop.permute.xlu0 %802
    %804 = vrot.lane.b32.xlu0 %v737, 8
    %v805 = vpop.permute.xlu0 %804
    %806 = vrot.lane.b32.xlu0 %v739, 8
    %v807 = vpop.permute.xlu0 %806
    %808 = vrot.lane.b32.xlu0 %v741, 8
    %v809 = vpop.permute.xlu0 %808
    %810 = vrot.lane.b32.xlu0 %v743, 8
    %v811 = vpop.permute.xlu0 %810
    %812 = vrot.lane.b32.xlu0 %v745, 8
    %v813 = vpop.permute.xlu0 %812
    %814 = vrot.lane.b32.xlu0 %v747, 8
    %v815 = vpop.permute.xlu0 %814
    %816 = vrot.lane.b32.xlu0 %v749, 8
    %v817 = vpop.permute.xlu0 %816
    %818 = vrot.lane.b32.xlu0 %v751, 8
    %v819 = vpop.permute.xlu0 %818
    %820 = vrot.lane.b32.xlu0 %v753, 8
    %v821 = vpop.permute.xlu0 %820
    %822 = vrot.lane.b32.xlu0 %v755, 8
    %v823 = vpop.permute.xlu0 %822
    %824 = vrot.lane.b32.xlu0 %v757, 8
    %v825 = vpop.permute.xlu0 %824
    %826 = vrot.lane.b32.xlu0 %v759, 8
    %v827 = vpop.permute.xlu0 %826
    %828 = vrot.lane.b32.xlu0 %v761, 8
    %v829 = vpop.permute.xlu0 %828
    %830 = vrot.lane.b32.xlu0 %v763, 8
    %v831 = vpop.permute.xlu0 %830
    %832 = vrot.lane.b32.xlu0 %v765, 8
    %v833 = vpop.permute.xlu0 %832
    %834 = vrot.lane.b32.xlu0 %v767, 8
    %v835 = vpop.permute.xlu0 %834
    %836 = vrot.lane.b32.xlu0 %v769, 8
    %v837 = vpop.permute.xlu0 %836
    %838 = vrot.lane.b32.xlu0 %v771, 8
    %v839 = vpop.permute.xlu0 %838
    %840 = vrot.lane.b32.xlu0 %v773, 8
    %v841 = vpop.permute.xlu0 %840
    %842 = vrot.lane.b32.xlu0 %v775, 8
    %v843 = vpop.permute.xlu0 %842
    %844 = vrot.lane.b32.xlu0 %v777, 8
    %v845 = vpop.permute.xlu0 %844
    %846 = vrot.lane.b32.xlu0 %v779, 8
    %v847 = vpop.permute.xlu0 %846
    %848 = vrot.lane.b32.xlu0 %v781, 8
    %v849 = vpop.permute.xlu0 %848
    %850 = vrot.lane.b32.xlu0 %v783, 8
    %v851 = vpop.permute.xlu0 %850
    %852 = vrot.lane.b32.xlu0 %v785, 8
    %v853 = vpop.permute.xlu0 %852
    %854 = vrot.lane.b32.xlu0 %v787, 8
    %v855 = vpop.permute.xlu0 %854
    %856 = vrot.lane.b32.xlu0 %v792, 8
    %v857 = vpop.permute.xlu0 %856
    %858 = vrot.lane.b32.xlu0 %v793, 8
    %v859 = vpop.permute.xlu0 %858
    %vm860 = vcmask 64512
    %v861 = vsel %vm860, %v797, %v799
    %v862 = vsel %vm860, %v801, %v803
    %v863 = vsel %vm860, %v805, %v807
    %v864 = vsel %vm860, %v809, %v811
    %v865 = vsel %vm860, %v813, %v815
    %v866 = vsel %vm860, %v817, %v819
    %v867 = vsel %vm860, %v821, %v823
    %v868 = vsel %vm860, %v825, %v827
    %v869 = vsel %vm860, %v829, %v831
    %v870 = vsel %vm860, %v833, %v835
    %v871 = vsel %vm860, %v837, %v839
    %v872 = vsel %vm860, %v841, %v843
    %v873 = vsel %vm860, %v845, %v847
    %v874 = vsel %vm860, %v849, %v851
    %v875 = vsel %vm860, %v853, %v855
    %v876 = vsel %vm860, %v857, %v859
    %v893 = vadd.f32 %v693, %v861
    %v894 = vadd.f32 %v694, %v862
    %v895 = vadd.f32 %v695, %v863
    %v896 = vadd.f32 %v696, %v864
    %v897 = vadd.f32 %v697, %v865
    %v898 = vadd.f32 %v698, %v866
    %v899 = vadd.f32 %v699, %v867
    %v900 = vadd.f32 %v700, %v868
    %v901 = vadd.f32 %v701, %v869
    %v902 = vadd.f32 %v702, %v870
    %v903 = vadd.f32 %v703, %v871
    %v904 = vadd.f32 %v704, %v872
    %v905 = vadd.f32 %v705, %v873
    %v906 = vadd.f32 %v706, %v874
    %v907 = vadd.f32 %v707, %v875
    %v908 = vadd.f32 %v708, %v876
    %vm909 = vcmask 1041408
    %v910 = vrot.slane %v201, 6
    %v911 = vrot.slane %v207, 6
    %v912 = vsel %vm909, %v910, %v911
    %v913 = vrot.slane %v213, 6
    %v914 = vsel %vm909, %v911, %v913
    %v915 = vrot.slane %v219, 6
    %v916 = vsel %vm909, %v913, %v915
    %v917 = vrot.slane %v225, 6
    %v918 = vsel %vm909, %v915, %v917
    %v919 = vrot.slane %v231, 6
    %v920 = vsel %vm909, %v917, %v919
    %v921 = vrot.slane %v237, 6
    %v922 = vsel %vm909, %v919, %v921
    %v923 = vrot.slane %v243, 6
    %v924 = vsel %vm909, %v921, %v923
    %v925 = vrot.slane %v249, 6
    %v926 = vsel %vm909, %v923, %v925
    %v927 = vrot.slane %v255, 6
    %v928 = vsel %vm909, %v925, %v927
    %v929 = vrot.slane %v261, 6
    %v930 = vsel %vm909, %v927, %v929
    %v931 = vrot.slane %v267, 6
    %v932 = vsel %vm909, %v929, %v931
    %v933 = vrot.slane %v273, 6
    %v934 = vsel %vm909, %v931, %v933
    %v935 = vrot.slane %v279, 6
    %v936 = vsel %vm909, %v933, %v935
    %v937 = vrot.slane %v285, 6
    %v938 = vsel %vm909, %v935, %v937
    %v939 = vrot.slane %v291, 6
    %v940 = vsel %vm909, %v937, %v939
    %v943 = vsel %vm909, %v939, %v910
    %945 = vrot.lane.b32.xlu0 %v912, 112
    %v946 = vpop.permute.xlu0 %945
    %947 = vrot.lane.b32.xlu0 %v914, 112
    %v948 = vpop.permute.xlu0 %947
    %949 = vrot.lane.b32.xlu0 %v916, 112
    %v950 = vpop.permute.xlu0 %949
    %951 = vrot.lane.b32.xlu0 %v918, 112
    %v952 = vpop.permute.xlu0 %951
    %953 = vrot.lane.b32.xlu0 %v920, 112
    %v954 = vpop.permute.xlu0 %953
    %955 = vrot.lane.b32.xlu0 %v922, 112
    %v956 = vpop.permute.xlu0 %955
    %957 = vrot.lane.b32.xlu0 %v924, 112
    %v958 = vpop.permute.xlu0 %957
    %959 = vrot.lane.b32.xlu0 %v926, 112
    %v960 = vpop.permute.xlu0 %959
    %961 = vrot.lane.b32.xlu0 %v928, 112
    %v962 = vpop.permute.xlu0 %961
    %963 = vrot.lane.b32.xlu0 %v930, 112
    %v964 = vpop.permute.xlu0 %963
    %965 = vrot.lane.b32.xlu0 %v932, 112
    %v966 = vpop.permute.xlu0 %965
    %967 = vrot.lane.b32.xlu0 %v934, 112
    %v968 = vpop.permute.xlu0 %967
    %969 = vrot.lane.b32.xlu0 %v936, 112
    %v970 = vpop.permute.xlu0 %969
    %971 = vrot.lane.b32.xlu0 %v938, 112
    %v972 = vpop.permute.xlu0 %971
    %973 = vrot.lane.b32.xlu0 %v940, 112
    %v974 = vpop.permute.xlu0 %973
    %975 = vrot.lane.b32.xlu0 %v943, 112
    %v976 = vpop.permute.xlu0 %975
    %v993 = vadd.f32 %v893, %v946
    %v994 = vadd.f32 %v894, %v948
    %v995 = vadd.f32 %v895, %v950
    %v996 = vadd.f32 %v896, %v952
    %v997 = vadd.f32 %v897, %v954
    %v998 = vadd.f32 %v898, %v956
    %v999 = vadd.f32 %v899, %v958
    %v1000 = vadd.f32 %v900, %v960
    %v1001 = vadd.f32 %v901, %v962
    %v1002 = vadd.f32 %v902, %v964
    %v1003 = vadd.f32 %v903, %v966
    %v1004 = vadd.f32 %v904, %v968
    %v1005 = vadd.f32 %v905, %v970
    %v1006 = vadd.f32 %v906, %v972
    %v1007 = vadd.f32 %v907, %v974
    %v1008 = vadd.f32 %v908, %v976
    %v1009 = vld [vmem:[#allocation7] sm:$0xff]
    %v1010 = vld [vmem:[#allocation7 + $0x8] sm:$0xff]
    %v1011 = vadd.f32 %v993, %v1009
    %v1012 = vadd.f32 %v994, %v1010
    %v1013 = vadd.f32 %v995, %v1009
    %v1014 = vadd.f32 %v996, %v1010
    %v1015 = vadd.f32 %v997, %v1009
    %v1016 = vadd.f32 %v998, %v1010
    %v1017 = vadd.f32 %v999, %v1009
    %v1018 = vadd.f32 %v1000, %v1010
    %v1019 = vadd.f32 %v1001, %v1009
    %v1020 = vadd.f32 %v1002, %v1010
    %v1021 = vadd.f32 %v1003, %v1009
    %v1022 = vadd.f32 %v1004, %v1010
    %v1023 = vadd.f32 %v1005, %v1009
    %v1024 = vadd.f32 %v1006, %v1010
    %v1025 = vadd.f32 %v1007, %v1009
    %v1026 = vadd.f32 %v1008, %v1010
    %vm1027 = vcmask 195584
    %v1028 = vsel %vm1027, %v1011, -inf
    %v1029 = vsel %vm1027, %v1012, -inf
    %v1030 = vmax.f32 %v1028, %v1029
    %v1031 = vrot.slane %v1030, 4
    %v1032 = vmax.f32 %v1030, %v1031
    %v1033 = vrot.slane %v1032, 2
    %v1034 = vmax.f32 %v1032, %v1033
    %v1035 = vrot.slane %v1034, 1
    %v1036 = vmax.f32 %v1034, %v1035
    %v1037 = vsel %vm1027, %v1013, -inf
    %v1038 = vsel %vm1027, %v1014, -inf
    %v1039 = vmax.f32 %v1037, %v1038
    %v1040 = vrot.slane %v1039, 4
    %v1041 = vmax.f32 %v1039, %v1040
    %v1042 = vrot.slane %v1041, 2
    %v1043 = vmax.f32 %v1041, %v1042
    %v1044 = vrot.slane %v1043, 1
    %v1045 = vmax.f32 %v1043, %v1044
    %v1046 = vsel %vm1027, %v1015, -inf
    %v1047 = vsel %vm1027, %v1016, -inf
    %v1048 = vmax.f32 %v1046, %v1047
    %v1049 = vrot.slane %v1048, 4
    %v1050 = vmax.f32 %v1048, %v1049
    %v1051 = vrot.slane %v1050, 2
    %v1052 = vmax.f32 %v1050, %v1051
    %v1053 = vrot.slane %v1052, 1
    %v1054 = vmax.f32 %v1052, %v1053
    %v1055 = vsel %vm1027, %v1017, -inf
    %v1056 = vsel %vm1027, %v1018, -inf
    %v1057 = vmax.f32 %v1055, %v1056
    %v1058 = vrot.slane %v1057, 4
    %v1059 = vmax.f32 %v1057, %v1058
    %v1060 = vrot.slane %v1059, 2
    %v1061 = vmax.f32 %v1059, %v1060
    %v1062 = vrot.slane %v1061, 1
    %v1063 = vmax.f32 %v1061, %v1062
    %v1064 = vsel %vm1027, %v1019, -inf
    %v1065 = vsel %vm1027, %v1020, -inf
    %v1066 = vmax.f32 %v1064, %v1065
    %v1067 = vrot.slane %v1066, 4
    %v1068 = vmax.f32 %v1066, %v1067
    %v1069 = vrot.slane %v1068, 2
    %v1070 = vmax.f32 %v1068, %v1069
    %v1071 = vrot.slane %v1070, 1
    %v1072 = vmax.f32 %v1070, %v1071
    %v1073 = vsel %vm1027, %v1021, -inf
    %v1074 = vsel %vm1027, %v1022, -inf
    %v1075 = vmax.f32 %v1073, %v1074
    %v1076 = vrot.slane %v1075, 4
    %v1077 = vmax.f32 %v1075, %v1076
    %v1078 = vrot.slane %v1077, 2
    %v1079 = vmax.f32 %v1077, %v1078
    %v1080 = vrot.slane %v1079, 1
    %v1081 = vmax.f32 %v1079, %v1080
    %v1082 = vsel %vm1027, %v1023, -inf
    %v1083 = vsel %vm1027, %v1024, -inf
    %v1084 = vmax.f32 %v1082, %v1083
    %v1085 = vrot.slane %v1084, 4
    %v1086 = vmax.f32 %v1084, %v1085
    %v1087 = vrot.slane %v1086, 2
    %v1088 = vmax.f32 %v1086, %v1087
    %v1089 = vrot.slane %v1088, 1
    %v1090 = vmax.f32 %v1088, %v1089
    %v1091 = vsel %vm1027, %v1025, -inf
    %v1092 = vsel %vm1027, %v1026, -inf
    %v1093 = vmax.f32 %v1091, %v1092
    %v1094 = vrot.slane %v1093, 4
    %v1095 = vmax.f32 %v1093, %v1094
    %v1096 = vrot.slane %v1095, 2
    %v1097 = vmax.f32 %v1095, %v1096
    %v1098 = vrot.slane %v1097, 1
    %v1099 = vmax.f32 %v1097, %v1098
    %v1100 = vld [vmem:[%s2] sm:$0x1]
    %v1102 = vlaneseq
    %v1103 = vshrl.u32 %v1102, 7
    %v1104 = vsub.s32 0, %v1103
    %v1105 = vrot.slane %v1100, %v1104
    %v1107 = vadd.f32 %v1036, %v1105
    %v1108 = vadd.f32 %v1045, %v1105
    %v1109 = vadd.f32 %v1054, %v1105
    %v1110 = vadd.f32 %v1063, %v1105
    %v1111 = vadd.f32 %v1072, %v1105
    %v1112 = vadd.f32 %v1081, %v1105
    %v1113 = vadd.f32 %v1090, %v1105
    %v1114 = vadd.f32 %v1099, %v1105
    %v1115 = vmax.f32 %v1107, 0.0
    %v1116 = vmax.f32 %v1108, 0.0
    %v1117 = vmax.f32 %v1109, 0.0
    %v1118 = vmax.f32 %v1110, 0.0
    %v1119 = vmax.f32 %v1111, 0.0
    %v1120 = vmax.f32 %v1112, 0.0
    %v1121 = vmax.f32 %v1113, 0.0
    %v1122 = vmax.f32 %v1114, 0.0
    %v1131 = vrot.slane %v1116, 7
    %vm1132 = vcmask 1041409
    %v1133 = vsel %vm1132, %v1131, %v1115
    %v1134 = vrot.slane %v1117, 6
    %vm1135 = vcmask 1042434
    %v1136 = vsel %vm1135, %v1134, %v1133
    %v1137 = vrot.slane %v1118, 5
    %vm1138 = vcmask 1043459
    %v1139 = vsel %vm1138, %v1137, %v1136
    %v1140 = vrot.slane %v1119, 4
    %vm1141 = vcmask 1044484
    %v1142 = vsel %vm1141, %v1140, %v1139
    %v1143 = vrot.slane %v1120, 3
    %vm1144 = vcmask 1045509
    %v1145 = vsel %vm1144, %v1143, %v1142
    %v1146 = vrot.slane %v1121, 2
    %vm1147 = vcmask 1046534
    %v1148 = vsel %vm1147, %v1146, %v1145
    %v1149 = vrot.slane %v1122, 1
    %vm1150 = vcmask 1047559
    %v1151 = vsel %vm1150, %v1149, %v1148
    %1153 = vst.msk [vmem:[#allocation8] sm:$0xff] %vm1027, %v1151
    // Predicated region
    $region30: #{tpu_custom_call.1} parent=1 // pred_check
      _
    $region31: #{tpu_custom_call.1} parent=1 // pred_check_branch
      %1155 = sbr.rel (0) target = $region33
    $region32: #{tpu_custom_call.1} parent=1 // pred_region
      %s1157 = ssub.s32 128, 128
      %1158 = vsyncadd [#allocation4], %s1157
      %s1160 = sshll.u32 [#allocation8], 4
      %s1161 = int_to_ptr.vmem [resolvable:$true] %s1160
      %1163 = dma.vmem_to_hbm [thread:$0]  %s1161, 128, %s4, [#allocation4]
    $region33: #{tpu_custom_call.1} parent=1 // pred_fallthru
      _
    // Predicated region
    $region34: #{tpu_custom_call.1} parent=1 // pred_check
      _
    $region35: #{tpu_custom_call.1} parent=1 // pred_check_branch
      %1165 = sbr.rel (0) target = $region37
    $region36: #{tpu_custom_call.1} parent=1 // pred_region
      %1166 = dma.done [#allocation4], 128
    $region37: #{tpu_custom_call.1} parent=1 // pred_fallthru
      _
    %1167 = vsyncpa [#allocation3], 1
    %1168 = vsyncpa [#allocation6], 1
    %1169 = vsyncpa [#allocation4], 1

</llo_original>
